<compile_context>
chip_gen: v5e
topology: v5e:2x2
jax: 0.10.0
libtpu: 0.0.40
codegen_flags: <defaults>
</compile_context>

<pallas_src>
import functools
import math

import jax
import jax.numpy as jnp
from jax.experimental import pallas as pl
from jax.experimental.pallas import tpu as pltpu


def linear_kernel(x_ref, w_ref, b_ref, h_ref):
    # H_tile = X_tile @ W + b   (bf16 MXU matmul, f32 accumulation,
    #                            bias broadcast once per tile)
    x = x_ref[...].astype(jnp.bfloat16)
    w = w_ref[...].astype(jnp.bfloat16)
    h = jnp.dot(x, w, preferred_element_type=jnp.float32)
    h = h + b_ref[...]                      # (1, Dpad) broadcasts over tm rows
    h_ref[...] = h.astype(h_ref.dtype)      # store bf16 for the streamed stage-2 matmul


def smooth_kernel(a_ref, h_ref, o_ref, acc_ref, *, tk):
    # S_tile = sum_k A_hat[i,k] @ H[k]  with f32 accumulator; ReLU in epilogue.
    # h_ref holds the WHOLE (npad, dpad) H resident in VMEM (constant block
    # index => DMA'd once); we slice the k-slab locally.
    k = pl.program_id(1)

    @pl.when(k == 0)
    def _():
        acc_ref[...] = jnp.zeros_like(acc_ref)

    start = pl.multiple_of(k * tk, 128)
    h_blk = h_ref[pl.ds(start, tk), :]
    acc_ref[...] += jnp.dot(a_ref[...], h_blk,
                            preferred_element_type=jnp.float32)

    @pl.when(k == pl.num_programs(1) - 1)
    def _():
        o_ref[...] = jnp.maximum(acc_ref[...], 0.0).astype(o_ref.dtype)


def gcn_conv(x, w_t, b, a_hat, *, tm=256, tk=512, lane=128):
    """GCNConv forward.

    x:     (N, Din)  f32 node features
    w_t:   (Din, Dout) f32  (theta.weight transposed)
    b:     (1, Dout) or (Dout,) f32
    a_hat: (N, N) symmetrically-normalized adjacency (preferably already bf16)
    returns (N, Dout) f32
    """
    N, Din = x.shape
    Dout = w_t.shape[1]
    b = jnp.reshape(b, (1, Dout)).astype(jnp.float32)

    # Lane-dense feature dim.
    dpad = pl.cdiv(Dout, lane) * lane

    # Clamp tiles to the (128-aligned) problem size so small demos still run
    # with a single tile; pad N to a common multiple of tm and tk so the grid
    # floor-divisions never drop rows/columns.
    n128 = pl.cdiv(N, 128) * 128
    tm = max(128, min(tm, n128))
    tk = max(128, min(tk, n128))
    step = math.lcm(tm, tk)
    npad = pl.cdiv(N, step) * step
    assert npad % tm == 0 and npad % tk == 0

    x_p = jnp.pad(x, ((0, npad - N), (0, 0)))
    w_p = jnp.pad(w_t, ((0, 0), (0, dpad - Dout)))
    b_p = jnp.pad(b, ((0, 0), (0, dpad - Dout)))

    # A_hat should be produced in bf16 upstream (avoids an extra N^2 HBM pass
    # here); zero-padded columns kill contributions from the padded H rows.
    if a_hat.dtype != jnp.bfloat16:
        a_hat = a_hat.astype(jnp.bfloat16)
    a_p = jnp.pad(a_hat, ((0, npad - N), (0, npad - N)))

    # ---- Stage 1: H = X @ W^T + b (computed once, stored lane-padded bf16) ----
    h = pl.pallas_call(
        linear_kernel,
        out_shape=jax.ShapeDtypeStruct((npad, dpad), jnp.bfloat16),
        grid_spec=pltpu.PrefetchScalarGridSpec(
            num_scalar_prefetch=0,
            grid=(npad // tm,),
            in_specs=[
                pl.BlockSpec((tm, Din), lambda i: (i, 0)),
                pl.BlockSpec((Din, dpad), lambda i: (0, 0)),
                pl.BlockSpec((1, dpad), lambda i: (0, 0)),
            ],
            out_specs=pl.BlockSpec((tm, dpad), lambda i: (i, 0)),
        ),
        compiler_params=pltpu.CompilerParams(
            dimension_semantics=("parallel",)),
    )(x_p, w_p, b_p)

    # ---- Stage 2: S = A_hat @ H, fused ReLU, tiled (row, k) reduction ----
    # Explicit VMEM budget: double-buffered A tile (bf16), resident H
    # (conservatively counted twice), f32 accumulator, double-buffered output.
    vmem_est = (2 * tm * tk * 2
                + 2 * npad * dpad * 2
                + tm * dpad * 4
                + 2 * tm * dpad * 4)
    vmem_limit = int(min(64 << 20, max(vmem_est + (2 << 20), 16 << 20)))

    out = pl.pallas_call(
        functools.partial(smooth_kernel, tk=tk),
        out_shape=jax.ShapeDtypeStruct((npad, dpad), jnp.float32),
        grid_spec=pltpu.PrefetchScalarGridSpec(
            num_scalar_prefetch=0,
            grid=(npad // tm, npad // tk),
            in_specs=[
                pl.BlockSpec((tm, tk), lambda i, k: (i, k)),      # A_hat tile
                pl.BlockSpec((npad, dpad), lambda i, k: (0, 0)),  # H, VMEM-resident
            ],
            out_specs=pl.BlockSpec((tm, dpad), lambda i, k: (i, 0)),
            scratch_shapes=[pltpu.VMEM((tm, dpad), jnp.float32)],
        ),
        compiler_params=pltpu.CompilerParams(
            dimension_semantics=("parallel", "arbitrary"),
            vmem_limit_bytes=vmem_limit),
    )(a_p, h)

    return out[:N, :Dout]


def reference(x, w_t, b, a_hat):
    h = x @ w_t + jnp.reshape(b, (1, -1))
    s = a_hat @ h
    return jnp.maximum(s, 0.0)


if __name__ == "__main__":
    # Small, module-consistent shapes: N nodes (not tile-aligned, exercises
    # padding), input_dim -> output_dim features.
    N, input_dim, output_dim = 200, 32, 32

    key = jax.random.PRNGKey(0)
    kx, kw, kb, ka = jax.random.split(key, 4)

    # Node features.
    x = jax.random.normal(kx, (N, input_dim), dtype=jnp.float32)

    # Deterministic "nn.Linear(input_dim, output_dim, bias=True)" init
    # (uniform in +/- 1/sqrt(input_dim), as PyTorch does), stored transposed.
    bound = 1.0 / float(jnp.sqrt(jnp.float32(input_dim)))
    w_t = jax.random.uniform(kw, (input_dim, output_dim),
                             minval=-bound, maxval=bound, dtype=jnp.float32)
    b = jax.random.uniform(kb, (1, output_dim),
                           minval=-bound, maxval=bound, dtype=jnp.float32)

    # Synthetic relation graph: random symmetric adjacency with self-loops,
    # symmetrically normalized (D^-1/2 (A+I) D^-1/2) — standard GCN smoothing.
    logits = jax.random.uniform(ka, (N, N), dtype=jnp.float32)
    adj = (logits > 0.8).astype(jnp.float32)
    adj = jnp.maximum(adj, adj.T)
    adj = adj + jnp.eye(N, dtype=jnp.float32)
    deg = jnp.sum(adj, axis=1)
    d_inv_sqrt = 1.0 / jnp.sqrt(deg)
    a_hat = adj * d_inv_sqrt[:, None] * d_inv_sqrt[None, :]

    # A_hat is handed to the kernel in bf16 (produced upstream, per review),
    # f32 copy kept only for the numerical reference.
    a_hat_bf16 = a_hat.astype(jnp.bfloat16)

    out = gcn_conv(x, w_t, b, a_hat_bf16)
    out = jax.block_until_ready(out)

    ref = reference(x, w_t, b, a_hat)
    assert out.shape == (N, output_dim)
    # Tolerance accounts for the bf16 quantization of the streamed A_hat / H
    # operands (f32 accumulation); error is well below 1e-2 at these scales.
    assert jnp.allclose(out, ref, atol=3e-2, rtol=3e-2), \
        float(jnp.max(jnp.abs(out - ref)))

    print("KERNEL_OK")
</pallas_src>

<mosaic_0001>
module attributes {stable_mosaic.version = 11 : i64} {
  func.func @linear_kernel(%arg0: i32, %arg1: memref<256x32xf32, #tpu.memory_space<vmem>>, %arg2: memref<32x128xf32, #tpu.memory_space<vmem>>, %arg3: memref<1x128xf32, #tpu.memory_space<vmem>>, %arg4: memref<256x128xbf16, #tpu.memory_space<vmem>>) attributes {dimension_semantics = [#tpu.dimension_semantics<parallel>], iteration_bounds = array<i64: 1>, scalar_prefetch = 0 : i64, scratch_operands = 0 : i64, tpu.core_type = #tpu.core_type<tc>, window_params = [{transform_indices = @transform_0, window_bounds = array<i64: 256, 32>}, {pipeline_mode = #tpu.pipeline_mode<synchronous>, transform_indices = @transform_1, window_bounds = array<i64: 32, 128>}, {pipeline_mode = #tpu.pipeline_mode<synchronous>, transform_indices = @transform_2, window_bounds = array<i64: 1, 128>}, {transform_indices = @transform_3, window_bounds = array<i64: 256, 128>}]} {
    %c0 = arith.constant 0 : index
    %c0_0 = arith.constant 0 : index
    %0 = vector.load %arg1[%c0, %c0_0] : memref<256x32xf32, #tpu.memory_space<vmem>>, vector<256x32xf32>
    %1 = arith.truncf %0 : vector<256x32xf32> to vector<256x32xbf16>
    %c0_1 = arith.constant 0 : index
    %c0_2 = arith.constant 0 : index
    %2 = vector.load %arg2[%c0_1, %c0_2] : memref<32x128xf32, #tpu.memory_space<vmem>>, vector<32x128xf32>
    %3 = arith.truncf %2 : vector<32x128xf32> to vector<32x128xbf16>
    %cst = arith.constant dense<0.000000e+00> : vector<256x128xf32>
    %4 = tpu.matmul %1, %3, %cst {dimension_numbers = #tpu.dot_dimension_numbers<[1], [0], [0], [1], [0, 0, 1, 1], [], []>} : vector<256x32xbf16>, vector<32x128xbf16>, vector<256x128xf32> -> vector<256x128xf32>
    %c0_3 = arith.constant 0 : index
    %c0_4 = arith.constant 0 : index
    %5 = vector.load %arg3[%c0_3, %c0_4] : memref<1x128xf32, #tpu.memory_space<vmem>>, vector<1x128xf32>
    %6 = vector.broadcast %5 : vector<1x128xf32> to vector<256x128xf32>
    %7 = arith.addf %4, %6 : vector<256x128xf32>
    %8 = arith.truncf %7 : vector<256x128xf32> to vector<256x128xbf16>
    %c0_5 = arith.constant 0 : index
    %c0_6 = arith.constant 0 : index
    %9 = vector.load %arg4[%c0_5, %c0_6] : memref<256x128xbf16, #tpu.memory_space<vmem>>, vector<256x128xbf16>
    tpu.vector_store %arg4[%c0_5, %c0_6], %8 {strides = array<i32>} : memref<256x128xbf16, #tpu.memory_space<vmem>>, vector<256x128xbf16>,
    return
  }
  func.func @transform_0(%arg0: i32) -> (i32, i32) {
    %c0_i32 = arith.constant 0 : i32
    %c0_i32_0 = arith.constant 0 : i32
    return %arg0, %c0_i32 : i32, i32
  }
  func.func @transform_1(%arg0: i32) -> (i32, i32) {
    %c0_i32 = arith.constant 0 : i32
    %c0_i32_0 = arith.constant 0 : i32
    %c0_i32_1 = arith.constant 0 : i32
    return %c0_i32, %c0_i32_0 : i32, i32
  }
  func.func @transform_2(%arg0: i32) -> (i32, i32) {
    %c0_i32 = arith.constant 0 : i32
    %c0_i32_0 = arith.constant 0 : i32
    %c0_i32_1 = arith.constant 0 : i32
    return %c0_i32, %c0_i32_0 : i32, i32
  }
  func.func @transform_3(%arg0: i32) -> (i32, i32) {
    %c0_i32 = arith.constant 0 : i32
    %c0_i32_0 = arith.constant 0 : i32
    return %arg0, %c0_i32 : i32, i32
  }
}

</mosaic_0001>

<llo_original>
// kernel: tpu_custom_call.1
$region0: #{tpu_custom_call.1}
  #allocation0 [shape = 'u32[]', space=smem, size = 0x4, offset = 0x4, fixed_abs, tag = 'smem constant byte address 0x4 - core index']
  #allocation1 [shape = 'u32[72,128]{1,0:T(1,128)}', space=vmem, size = 0x9000, scoped, tag = 'internal scratch']
  %s0 = inlined_call_operand.vmem [shape: f32[256,32], index: 0, kind: input, shape index: {}]
  %s1 = inlined_call_operand.vmem [shape: f32[32,128], index: 1, kind: input, shape index: {}]
  %s2 = inlined_call_operand.vmem [shape: f32[1,128], index: 2, kind: input, shape index: {}]
  %s3 = inlined_call_operand.hbm [shape: bf16[256,128], index: 3, kind: output, shape index: {}]
  %s4 = sld [smem:[#allocation0]]
  $region22: #{tpu_custom_call.1} parent=0
    _
  %s6 = ssub.s32 1, %s4
  %s7 = scalar_select 0, %s6, %s4
  $region1: #{tpu_custom_call.1} parent=0
    #allocation2 [shape = 'u8[65536]{0}', space=vmem, size = 0x10000, scoped, tag = 'output window, operand 0, single buffered']
    #allocation3 [shape = 's32[1]{0}', space=sflag, size = 0x4, scoped, tag = 'scoped memory for tpu_custom_call.1']
    %8 = vsyncpa [#allocation3], 0
    // Predicated region
    $region2: #{tpu_custom_call.1} parent=1 // pred_check
      _
    $region3: #{tpu_custom_call.1} parent=1 // pred_check_branch
      %10 = sbr.rel (0) target = $region5
    $region4: #{tpu_custom_call.1} parent=1 // pred_region
      _
    $region5: #{tpu_custom_call.1} parent=1 // pred_fallthru
      _
    // Predicated region
    $region6: #{tpu_custom_call.1} parent=1 // pred_check
      _
    $region7: #{tpu_custom_call.1} parent=1 // pred_check_branch
      %12 = sbr.rel (0) target = $region9
    $region8: #{tpu_custom_call.1} parent=1 // pred_region
      _
    $region9: #{tpu_custom_call.1} parent=1 // pred_fallthru
      _
    // Predicated region
    $region10: #{tpu_custom_call.1} parent=1 // pred_check
      _
    $region11: #{tpu_custom_call.1} parent=1 // pred_check_branch
      %14 = sbr.rel (0) target = $region13
    $region12: #{tpu_custom_call.1} parent=1 // pred_region
      _
    $region13: #{tpu_custom_call.1} parent=1 // pred_fallthru
      _
    %v16 = vld [vmem:[%s0] sm:$0xff]
    %v17 = vld [vmem:[%s0 + $0x8] sm:$0xff]
    %v18 = vld [vmem:[%s0 + $0x10] sm:$0xff]
    %v19 = vld [vmem:[%s0 + $0x18] sm:$0xff]
    %v20 = vld [vmem:[%s0 + $0x20] sm:$0xff]
    %v21 = vld [vmem:[%s0 + $0x28] sm:$0xff]
    %v22 = vld [vmem:[%s0 + $0x30] sm:$0xff]
    %v23 = vld [vmem:[%s0 + $0x38] sm:$0xff]
    %v24 = vld [vmem:[%s0 + $0x40] sm:$0xff]
    %v25 = vld [vmem:[%s0 + $0x48] sm:$0xff]
    %v26 = vld [vmem:[%s0 + $0x50] sm:$0xff]
    %v27 = vld [vmem:[%s0 + $0x58] sm:$0xff]
    %v28 = vld [vmem:[%s0 + $0x60] sm:$0xff]
    %v29 = vld [vmem:[%s0 + $0x68] sm:$0xff]
    %v30 = vld [vmem:[%s0 + $0x70] sm:$0xff]
    %v31 = vld [vmem:[%s0 + $0x78] sm:$0xff]
    %v32 = vld [vmem:[%s0 + $0x80] sm:$0xff]
    %v33 = vld [vmem:[%s0 + $0x88] sm:$0xff]
    %v34 = vld [vmem:[%s0 + $0x90] sm:$0xff]
    %v35 = vld [vmem:[%s0 + $0x98] sm:$0xff]
    %v36 = vld [vmem:[%s0 + $0xa0] sm:$0xff]
    %v37 = vld [vmem:[%s0 + $0xa8] sm:$0xff]
    %v38 = vld [vmem:[%s0 + $0xb0] sm:$0xff]
    %v39 = vld [vmem:[%s0 + $0xb8] sm:$0xff]
    %v40 = vld [vmem:[%s0 + $0xc0] sm:$0xff]
    %v41 = vld [vmem:[%s0 + $0xc8] sm:$0xff]
    %v42 = vld [vmem:[%s0 + $0xd0] sm:$0xff]
    %v43 = vld [vmem:[%s0 + $0xd8] sm:$0xff]
    %v44 = vld [vmem:[%s0 + $0xe0] sm:$0xff]
    %v45 = vld [vmem:[%s0 + $0xe8] sm:$0xff]
    %v46 = vld [vmem:[%s0 + $0xf0] sm:$0xff]
    %v47 = vld [vmem:[%s0 + $0xf8] sm:$0xff]
    %v48 = vpack.c.bf16 %v17, %v16
    %v49 = vpack.c.bf16 %v19, %v18
    %v50 = vpack.c.bf16 %v21, %v20
    %v51 = vpack.c.bf16 %v23, %v22
    %v52 = vpack.c.bf16 %v25, %v24
    %v53 = vpack.c.bf16 %v27, %v26
    %v54 = vpack.c.bf16 %v29, %v28
    %v55 = vpack.c.bf16 %v31, %v30
    %v56 = vpack.c.bf16 %v33, %v32
    %v57 = vpack.c.bf16 %v35, %v34
    %v58 = vpack.c.bf16 %v37, %v36
    %v59 = vpack.c.bf16 %v39, %v38
    %v60 = vpack.c.bf16 %v41, %v40
    %v61 = vpack.c.bf16 %v43, %v42
    %v62 = vpack.c.bf16 %v45, %v44
    %v63 = vpack.c.bf16 %v47, %v46
    %v64 = vld [vmem:[%s1] sm:$0xff]
    %v65 = vld [vmem:[%s1 + $0x8] sm:$0xff]
    %v66 = vld [vmem:[%s1 + $0x10] sm:$0xff]
    %v67 = vld [vmem:[%s1 + $0x18] sm:$0xff]
    %v68 = vpack.c.bf16 %v65, %v64
    %v69 = vpack.c.bf16 %v67, %v66
    %v70 = vld [vmem:[%s2] sm:$0x1]
    %v72 = vperm.slane %v70, 0
    %vm74 = vcmask 261120
    %v76 = vsel %vm74, %v48, 0
    %v79 = vsel %vm74, %v49, 0
    %v82 = vsel %vm74, %v50, 0
    %v85 = vsel %vm74, %v51, 0
    %v88 = vsel %vm74, %v52, 0
    %v91 = vsel %vm74, %v53, 0
    %v94 = vsel %vm74, %v54, 0
    %v97 = vsel %vm74, %v55, 0
    %v100 = vsel %vm74, %v56, 0
    %v103 = vsel %vm74, %v57, 0
    %v106 = vsel %vm74, %v58, 0
    %v109 = vsel %vm74, %v59, 0
    %v112 = vsel %vm74, %v60, 0
    %v115 = vsel %vm74, %v61, 0
    %v118 = vsel %vm74, %v62, 0
    %v121 = vsel %vm74, %v63, 0
    %123 = vmatpush.bf16.msra.mxu0 0
    %124 = vmatpush.bf16.msra.mxu0 0
    %125 = vmatpush.bf16.msra.mxu0 0
    %126 = vmatpush.bf16.msra.mxu0 0
    %127 = vmatpush.bf16.msra.mxu0 0
    %128 = vmatpush.bf16.msra.mxu0 0
    %129 = vmatpush.bf16.msra.mxu0 %v69
    %130 = vmatpush.bf16.msra.mxu0 %v68
    %131 = vmatmul.bf16.gmra.mxu0 %v76
    %v132 = vpop.f32.mrf.mxu0
    %v133 = vadd.f32 %v72, %v132
    %v134 = vpop.f32.mrf.mxu0
    %v135 = vadd.f32 %v72, %v134
    %136 = vmatmul.bf16.gmra.mxu0 %v79
    %v137 = vpop.f32.mrf.mxu0
    %v138 = vadd.f32 %v72, %v137
    %v139 = vpop.f32.mrf.mxu0
    %v140 = vadd.f32 %v72, %v139
    %141 = vmatmul.bf16.gmra.mxu0 %v82
    %v142 = vpop.f32.mrf.mxu0
    %v143 = vadd.f32 %v72, %v142
    %v144 = vpop.f32.mrf.mxu0
    %v145 = vadd.f32 %v72, %v144
    %146 = vmatmul.bf16.gmra.mxu0 %v85
    %v147 = vpop.f32.mrf.mxu0
    %v148 = vadd.f32 %v72, %v147
    %v149 = vpop.f32.mrf.mxu0
    %v150 = vadd.f32 %v72, %v149
    %151 = vmatmul.bf16.gmra.mxu0 %v88
    %v152 = vpop.f32.mrf.mxu0
    %v153 = vadd.f32 %v72, %v152
    %v154 = vpop.f32.mrf.mxu0
    %v155 = vadd.f32 %v72, %v154
    %156 = vmatmul.bf16.gmra.mxu0 %v91
    %v157 = vpop.f32.mrf.mxu0
    %v158 = vadd.f32 %v72, %v157
    %v159 = vpop.f32.mrf.mxu0
    %v160 = vadd.f32 %v72, %v159
    %161 = vmatmul.bf16.gmra.mxu0 %v94
    %v162 = vpop.f32.mrf.mxu0
    %v163 = vadd.f32 %v72, %v162
    %v164 = vpop.f32.mrf.mxu0
    %v165 = vadd.f32 %v72, %v164
    %166 = vmatmul.bf16.gmra.mxu0 %v97
    %v167 = vpop.f32.mrf.mxu0
    %v168 = vadd.f32 %v72, %v167
    %v169 = vpop.f32.mrf.mxu0
    %v170 = vadd.f32 %v72, %v169
    %171 = vmatmul.bf16.gmra.mxu0 %v100
    %v172 = vpop.f32.mrf.mxu0
    %v173 = vadd.f32 %v72, %v172
    %v174 = vpop.f32.mrf.mxu0
    %v175 = vadd.f32 %v72, %v174
    %176 = vmatmul.bf16.gmra.mxu0 %v103
    %v177 = vpop.f32.mrf.mxu0
    %v178 = vadd.f32 %v72, %v177
    %v179 = vpop.f32.mrf.mxu0
    %v180 = vadd.f32 %v72, %v179
    %181 = vmatmul.bf16.gmra.mxu0 %v106
    %v182 = vpop.f32.mrf.mxu0
    %v183 = vadd.f32 %v72, %v182
    %v184 = vpop.f32.mrf.mxu0
    %v185 = vadd.f32 %v72, %v184
    %186 = vmatmul.bf16.gmra.mxu0 %v109
    %v187 = vpop.f32.mrf.mxu0
    %v188 = vadd.f32 %v72, %v187
    %v189 = vpop.f32.mrf.mxu0
    %v190 = vadd.f32 %v72, %v189
    %191 = vmatmul.bf16.gmra.mxu0 %v112
    %v192 = vpop.f32.mrf.mxu0
    %v193 = vadd.f32 %v72, %v192
    %v194 = vpop.f32.mrf.mxu0
    %v195 = vadd.f32 %v72, %v194
    %196 = vmatmul.bf16.gmra.mxu0 %v115
    %v197 = vpop.f32.mrf.mxu0
    %v198 = vadd.f32 %v72, %v197
    %v199 = vpop.f32.mrf.mxu0
    %v200 = vadd.f32 %v72, %v199
    %201 = vmatmul.bf16.gmra.mxu0 %v118
    %v202 = vpop.f32.mrf.mxu0
    %v203 = vadd.f32 %v72, %v202
    %v204 = vpop.f32.mrf.mxu0
    %v205 = vadd.f32 %v72, %v204
    %206 = vmatmul.bf16.gmra.mxu0 %v121
    %v207 = vpop.f32.mrf.mxu0
    %v208 = vadd.f32 %v72, %v207
    %v209 = vpop.f32.mrf.mxu0
    %v210 = vadd.f32 %v72, %v209
    %211 = vdwg.mxu0
    %v212 = vpack.c.bf16 %v133, %v133
    %v213 = vpack.c.bf16 %v135, %v135
    %v214 = vpack.c.bf16 %v138, %v138
    %v215 = vpack.c.bf16 %v140, %v140
    %v216 = vpack.c.bf16 %v143, %v143
    %v217 = vpack.c.bf16 %v145, %v145
    %v218 = vpack.c.bf16 %v148, %v148
    %v219 = vpack.c.bf16 %v150, %v150
    %v220 = vpack.c.bf16 %v153, %v153
    %v221 = vpack.c.bf16 %v155, %v155
    %v222 = vpack.c.bf16 %v158, %v158
    %v223 = vpack.c.bf16 %v160, %v160
    %v224 = vpack.c.bf16 %v163, %v163
    %v225 = vpack.c.bf16 %v165, %v165
    %v226 = vpack.c.bf16 %v168, %v168
    %v227 = vpack.c.bf16 %v170, %v170
    %v228 = vpack.c.bf16 %v173, %v173
    %v229 = vpack.c.bf16 %v175, %v175
    %v230 = vpack.c.bf16 %v178, %v178
    %v231 = vpack.c.bf16 %v180, %v180
    %v232 = vpack.c.bf16 %v183, %v183
    %v233 = vpack.c.bf16 %v185, %v185
    %v234 = vpack.c.bf16 %v188, %v188
    %v235 = vpack.c.bf16 %v190, %v190
    %v236 = vpack.c.bf16 %v193, %v193
    %v237 = vpack.c.bf16 %v195, %v195
    %v238 = vpack.c.bf16 %v198, %v198
    %v239 = vpack.c.bf16 %v200, %v200
    %v240 = vpack.c.bf16 %v203, %v203
    %v241 = vpack.c.bf16 %v205, %v205
    %v242 = vpack.c.bf16 %v208, %v208
    %v243 = vpack.c.bf16 %v210, %v210
    %244 = vst [vmem:[#allocation2] sm:$0xf] %v212
    %245 = vst [vmem:[#allocation2 + $0x4] sm:$0xf] %v213
    %246 = vst [vmem:[#allocation2 + $0x8] sm:$0xf] %v214
    %247 = vst [vmem:[#allocation2 + $0xc] sm:$0xf] %v215
    %248 = vst [vmem:[#allocation2 + $0x10] sm:$0xf] %v216
    %249 = vst [vmem:[#allocation2 + $0x14] sm:$0xf] %v217
    %250 = vst [vmem:[#allocation2 + $0x18] sm:$0xf] %v218
    %251 = vst [vmem:[#allocation2 + $0x1c] sm:$0xf] %v219
    %252 = vst [vmem:[#allocation2 + $0x20] sm:$0xf] %v220
    %253 = vst [vmem:[#allocation2 + $0x24] sm:$0xf] %v221
    %254 = vst [vmem:[#allocation2 + $0x28] sm:$0xf] %v222
    %255 = vst [vmem:[#allocation2 + $0x2c] sm:$0xf] %v223
    %256 = vst [vmem:[#allocation2 + $0x30] sm:$0xf] %v224
    %257 = vst [vmem:[#allocation2 + $0x34] sm:$0xf] %v225
    %258 = vst [vmem:[#allocation2 + $0x38] sm:$0xf] %v226
    %259 = vst [vmem:[#allocation2 + $0x3c] sm:$0xf] %v227
    %260 = vst [vmem:[#allocation2 + $0x40] sm:$0xf] %v228
    %261 = vst [vmem:[#allocation2 + $0x44] sm:$0xf] %v229
    %262 = vst [vmem:[#allocation2 + $0x48] sm:$0xf] %v230
    %263 = vst [vmem:[#allocation2 + $0x4c] sm:$0xf] %v231
    %264 = vst [vmem:[#allocation2 + $0x50] sm:$0xf] %v232
    %265 = vst [vmem:[#allocation2 + $0x54] sm:$0xf] %v233
    %266 = vst [vmem:[#allocation2 + $0x58] sm:$0xf] %v234
    %267 = vst [vmem:[#allocation2 + $0x5c] sm:$0xf] %v235
    %268 = vst [vmem:[#allocation2 + $0x60] sm:$0xf] %v236
    %269 = vst [vmem:[#allocation2 + $0x64] sm:$0xf] %v237
    %270 = vst [vmem:[#allocation2 + $0x68] sm:$0xf] %v238
    %271 = vst [vmem:[#allocation2 + $0x6c] sm:$0xf] %v239
    %272 = vst [vmem:[#allocation2 + $0x70] sm:$0xf] %v240
    %273 = vst [vmem:[#allocation2 + $0x74] sm:$0xf] %v241
    %274 = vst [vmem:[#allocation2 + $0x78] sm:$0xf] %v242
    %275 = vst [vmem:[#allocation2 + $0x7c] sm:$0xf] %v243
    // Predicated region
    $region14: #{tpu_custom_call.1} parent=1 // pred_check
      _
    $region15: #{tpu_custom_call.1} parent=1 // pred_check_branch
      %277 = sbr.rel (0) target = $region17
    $region16: #{tpu_custom_call.1} parent=1 // pred_region
      %279 = vsyncadd [#allocation3], 0
      %s280 = sshll.u32 [#allocation2], 4
      %s281 = int_to_ptr.vmem [resolvable:$true] %s280
      %s282 = sshll.u32 %s3, 4
      %s283 = int_to_ptr.hbm [resolvable:$true] %s282
      %288 = dma.vmem_to_hbm [thread:$0]  %s281, 2048, %s283, [#allocation3], 64, 64, 4
    $region17: #{tpu_custom_call.1} parent=1 // pred_fallthru
      _
    // Predicated region
    $region18: #{tpu_custom_call.1} parent=1 // pred_check
      _
    $region19: #{tpu_custom_call.1} parent=1 // pred_check_branch
      %290 = sbr.rel (0) target = $region21
    $region20: #{tpu_custom_call.1} parent=1 // pred_region
      %292 = dma.done [#allocation3], 2048
    $region21: #{tpu_custom_call.1} parent=1 // pred_fallthru
      _
    %293 = vsyncpa [#allocation3], 1

</llo_original>
